<compile_context>
chip_gen: v7x
topology: tpu7x:2x2x1
jax: 0.10.0
libtpu: 0.0.40
codegen_flags: <defaults>
</compile_context>

<pallas_src>
import jax
import jax.numpy as jnp
from jax.experimental import pallas as pl
from jax.experimental.pallas import tpu as pltpu


def content_model_kernel(x_ref, w1_ref, b1_ref, w2_ref, b2_ref, w3_ref, b3_ref, o_ref):
    # Fused 3-layer MLP on one batch tile.  Big matmuls hit the MXU with f32 accum.
    x = x_ref[...].astype(jnp.float32)            # upcast if inputs were stored bf16
    h1 = jnp.dot(x, w1_ref[...], preferred_element_type=jnp.float32) + b1_ref[...]
    h1 = jnp.maximum(h1, 0.0)
    h2 = jnp.dot(h1, w2_ref[...], preferred_element_type=jnp.float32) + b2_ref[...]
    h2 = jnp.maximum(h2, 0.0)
    # fc4 (64 -> 1): contract feature axes of (1,64) x (tile_b,64) so the result
    # is produced lane-dense as (1, tile_b) (batch on lanes), avoiding the
    # sublane-only (tile_b, 1) store path.
    y = jax.lax.dot_general(
        w3_ref[...], h2,
        dimension_numbers=(((1,), (1,)), ((), ())),
        preferred_element_type=jnp.float32) + b3_ref[...]          # (1, tile_b)
    o_ref[...] = y[None].astype(o_ref.dtype)                        # (1, 1, tile_b)


def _round_up(n, m):
    return ((n + m - 1) // m) * m


def _pick_tile_b(B, max_tile_b=1024):
    # Big tiles amortize per-grid-step overhead; keep >=2 grid steps when the
    # batch allows (v7x has 2 TensorCores).  Multiple of 16 satisfies the
    # sublane constraint for both f32 (8) and bf16 (16) input blocks.
    half = -(-B // 2)
    return int(min(max_tile_b, max(16, _round_up(half, 16))))


def content_model_forward(x, params, *, tile_b=None, max_tile_b=1024, input_dtype=None):
    """x: [B, D].  params: w1[D,128], b1[1,128], w2[128,64], b2[1,64],
    w3[1,64] (PyTorch fc4.weight layout), b3[1,1].  Returns [B, 1] float32."""
    B, D = x.shape
    if tile_b is None:
        tile_b = _pick_tile_b(B, max_tile_b)
    tile_b = int(_round_up(int(tile_b), 16))

    if input_dtype is not None and x.dtype != input_dtype:
        x = x.astype(input_dtype)          # e.g. bf16: halves dominant HBM read traffic

    B_pad = _round_up(B, tile_b)
    if B_pad != B:
        x = jnp.pad(x, ((0, B_pad - B), (0, 0)))   # padded rows are sliced off below
    num_tiles = B_pad // tile_b

    w1, b1 = params["w1"], params["b1"]
    w2, b2 = params["w2"], params["b2"]
    w3, b3 = params["w3"], params["b3"]

    out = pl.pallas_call(
        content_model_kernel,
        out_shape=jax.ShapeDtypeStruct((num_tiles, 1, tile_b), jnp.float32),
        grid_spec=pltpu.PrefetchScalarGridSpec(
            num_scalar_prefetch=0,
            grid=(num_tiles,),
            in_specs=[
                pl.BlockSpec((tile_b, D), lambda i: (i, 0)),   # x tile (streamed)
                pl.BlockSpec(w1.shape, lambda i: (0, 0)),      # weights/biases: full
                pl.BlockSpec(b1.shape, lambda i: (0, 0)),      # blocks, constant index
                pl.BlockSpec(w2.shape, lambda i: (0, 0)),      # maps -> VMEM resident
                pl.BlockSpec(b2.shape, lambda i: (0, 0)),      # across grid steps
                pl.BlockSpec(w3.shape, lambda i: (0, 0)),
                pl.BlockSpec(b3.shape, lambda i: (0, 0)),
            ],
            out_specs=pl.BlockSpec((1, 1, tile_b), lambda i: (i, 0, 0)),  # lane-dense
        ),
        compiler_params=pltpu.CompilerParams(
            dimension_semantics=("parallel",)),
    )(x, w1, b1, w2, b2, w3, b3)

    # (num_tiles, 1, tile_b) lane-dense slab -> (B, 1), dropping batch padding.
    return out.reshape(B_pad)[:B].reshape(B, 1)


def init_params(key, input_dim):
    """Deterministic init matching nn.Linear default (U[-1/sqrt(fan_in), 1/sqrt(fan_in)]).
    fc1/fc2 weights stored as [in, out]; fc4 weight kept in PyTorch [out, in] layout."""
    def linear(key, fan_in, fan_out, transpose=True):
        kw, kb = jax.random.split(key)
        bound = 1.0 / jnp.sqrt(jnp.float32(fan_in))
        shape = (fan_in, fan_out) if transpose else (fan_out, fan_in)
        w = jax.random.uniform(kw, shape, jnp.float32, -bound, bound)
        b = jax.random.uniform(kb, (1, fan_out), jnp.float32, -bound, bound)
        return w, b

    k1, k2, k3 = jax.random.split(key, 3)
    w1, b1 = linear(k1, input_dim, 128)
    w2, b2 = linear(k2, 128, 64)
    w3, b3 = linear(k3, 64, 1, transpose=False)   # [1, 64] like PyTorch fc4.weight
    return {"w1": w1, "b1": b1, "w2": w2, "b2": b2, "w3": w3, "b3": b3}


def reference_forward(x, p):
    h1 = jnp.maximum(x @ p["w1"] + p["b1"], 0.0)
    h2 = jnp.maximum(h1 @ p["w2"] + p["b2"], 0.0)
    return h2 @ p["w3"].T + p["b3"]


if __name__ == "__main__":
    # Small shapes consistent with the module: input_dim = places features
    # (4 numeric + C one-hot) + user features (C one-hot + 1 budget); with
    # C = 20 combined categories -> 45.  Batch = 91 candidate places
    # (also exercises the padded-tail / 2-tile path: tile_b=48, B_pad=96).
    B, INPUT_DIM = 91, 45

    key = jax.random.PRNGKey(0)
    kx, kp = jax.random.split(key)
    x = jax.random.normal(kx, (B, INPUT_DIM), jnp.float32)
    params = init_params(kp, INPUT_DIM)

    out = jax.block_until_ready(content_model_forward(x, params))
    ref = reference_forward(x, params)
    assert out.shape == (B, 1)
    assert jnp.allclose(out, ref, atol=1e-5, rtol=1e-5)

    # Optional bf16-input path (halves the dominant HBM read on v6e/v7x);
    # element-wise math & accumulation stay f32 in-kernel.
    out_bf16 = jax.block_until_ready(
        content_model_forward(x, params, input_dtype=jnp.bfloat16))
    assert out_bf16.shape == (B, 1)
    assert bool(jnp.all(jnp.isfinite(out_bf16)))

    print("KERNEL_OK")
</pallas_src>

<mosaic_0001>
module attributes {stable_mosaic.version = 11 : i64} {
  func.func @content_model_kernel(%arg0: i32, %arg1: memref<48x45xf32, #tpu.memory_space<vmem>>, %arg2: memref<45x128xf32, #tpu.memory_space<vmem>>, %arg3: memref<1x128xf32, #tpu.memory_space<vmem>>, %arg4: memref<128x64xf32, #tpu.memory_space<vmem>>, %arg5: memref<1x64xf32, #tpu.memory_space<vmem>>, %arg6: memref<1x64xf32, #tpu.memory_space<vmem>>, %arg7: memref<1x1xf32, #tpu.memory_space<vmem>>, %arg8: memref<1x1x48xf32, #tpu.memory_space<vmem>>) attributes {dimension_semantics = [#tpu.dimension_semantics<parallel>], iteration_bounds = array<i64: 2>, scalar_prefetch = 0 : i64, scratch_operands = 0 : i64, tpu.core_type = #tpu.core_type<tc>, window_params = [{transform_indices = @transform_0, window_bounds = array<i64: 48, 45>}, {pipeline_mode = #tpu.pipeline_mode<synchronous>, transform_indices = @transform_1, window_bounds = array<i64: 45, 128>}, {pipeline_mode = #tpu.pipeline_mode<synchronous>, transform_indices = @transform_2, window_bounds = array<i64: 1, 128>}, {pipeline_mode = #tpu.pipeline_mode<synchronous>, transform_indices = @transform_3, window_bounds = array<i64: 128, 64>}, {pipeline_mode = #tpu.pipeline_mode<synchronous>, transform_indices = @transform_4, window_bounds = array<i64: 1, 64>}, {pipeline_mode = #tpu.pipeline_mode<synchronous>, transform_indices = @transform_5, window_bounds = array<i64: 1, 64>}, {pipeline_mode = #tpu.pipeline_mode<synchronous>, transform_indices = @transform_6, window_bounds = array<i64: 1, 1>}, {transform_indices = @transform_7, window_bounds = array<i64: 1, 1, 48>}]} {
    %c0 = arith.constant 0 : index
    %c0_0 = arith.constant 0 : index
    %0 = vector.load %arg1[%c0, %c0_0] : memref<48x45xf32, #tpu.memory_space<vmem>>, vector<48x45xf32>
    %c0_1 = arith.constant 0 : index
    %c0_2 = arith.constant 0 : index
    %1 = vector.load %arg2[%c0_1, %c0_2] : memref<45x128xf32, #tpu.memory_space<vmem>>, vector<45x128xf32>
    %cst = arith.constant dense<0.000000e+00> : vector<48x128xf32>
    %2 = tpu.matmul %0, %1, %cst {dimension_numbers = #tpu.dot_dimension_numbers<[1], [0], [0], [1], [0, 0, 1, 1], [], []>} : vector<48x45xf32>, vector<45x128xf32>, vector<48x128xf32> -> vector<48x128xf32>
    %c0_3 = arith.constant 0 : index
    %c0_4 = arith.constant 0 : index
    %3 = vector.load %arg3[%c0_3, %c0_4] : memref<1x128xf32, #tpu.memory_space<vmem>>, vector<1x128xf32>
    %4 = vector.broadcast %3 : vector<1x128xf32> to vector<48x128xf32>
    %5 = arith.addf %2, %4 : vector<48x128xf32>
    %cst_5 = arith.constant 0.000000e+00 : f32
    %6 = vector.broadcast %cst_5 : f32 to vector<48x128xf32>
    %7 = arith.maximumf %5, %6 : vector<48x128xf32>
    %c0_6 = arith.constant 0 : index
    %c0_7 = arith.constant 0 : index
    %8 = vector.load %arg4[%c0_6, %c0_7] : memref<128x64xf32, #tpu.memory_space<vmem>>, vector<128x64xf32>
    %cst_8 = arith.constant dense<0.000000e+00> : vector<48x64xf32>
    %9 = tpu.matmul %7, %8, %cst_8 {dimension_numbers = #tpu.dot_dimension_numbers<[1], [0], [0], [1], [0, 0, 1, 1], [], []>} : vector<48x128xf32>, vector<128x64xf32>, vector<48x64xf32> -> vector<48x64xf32>
    %c0_9 = arith.constant 0 : index
    %c0_10 = arith.constant 0 : index
    %10 = vector.load %arg5[%c0_9, %c0_10] : memref<1x64xf32, #tpu.memory_space<vmem>>, vector<1x64xf32>
    %11 = vector.broadcast %10 : vector<1x64xf32> to vector<48x64xf32>
    %12 = arith.addf %9, %11 : vector<48x64xf32>
    %cst_11 = arith.constant 0.000000e+00 : f32
    %13 = vector.broadcast %cst_11 : f32 to vector<48x64xf32>
    %14 = arith.maximumf %12, %13 : vector<48x64xf32>
    %c0_12 = arith.constant 0 : index
    %c0_13 = arith.constant 0 : index
    %15 = vector.load %arg6[%c0_12, %c0_13] : memref<1x64xf32, #tpu.memory_space<vmem>>, vector<1x64xf32>
    %cst_14 = arith.constant dense<0.000000e+00> : vector<1x48xf32>
    %16 = tpu.matmul %15, %14, %cst_14 {dimension_numbers = #tpu.dot_dimension_numbers<[1], [1], [0], [0], [0, 0, 1, 0], [], []>} : vector<1x64xf32>, vector<48x64xf32>, vector<1x48xf32> -> vector<1x48xf32>
    %c0_15 = arith.constant 0 : index
    %c0_16 = arith.constant 0 : index
    %17 = vector.load %arg7[%c0_15, %c0_16] : memref<1x1xf32, #tpu.memory_space<vmem>>, vector<1x1xf32>
    %18 = vector.broadcast %17 : vector<1x1xf32> to vector<1x48xf32>
    %19 = arith.addf %16, %18 : vector<1x48xf32>
    %20 = vector.shape_cast %19 : vector<1x48xf32> to vector<1x1x48xf32>
    %c0_17 = arith.constant 0 : index
    %c0_18 = arith.constant 0 : index
    %c0_19 = arith.constant 0 : index
    %21 = vector.load %arg8[%c0_17, %c0_18, %c0_19] : memref<1x1x48xf32, #tpu.memory_space<vmem>>, vector<1x1x48xf32>
    tpu.vector_store %arg8[%c0_17, %c0_18, %c0_19], %20 {strides = array<i32>} : memref<1x1x48xf32, #tpu.memory_space<vmem>>, vector<1x1x48xf32>,
    return
  }
  func.func @transform_0(%arg0: i32) -> (i32, i32) {
    %c0_i32 = arith.constant 0 : i32
    %c0_i32_0 = arith.constant 0 : i32
    return %arg0, %c0_i32 : i32, i32
  }
  func.func @transform_1(%arg0: i32) -> (i32, i32) {
    %c0_i32 = arith.constant 0 : i32
    %c0_i32_0 = arith.constant 0 : i32
    %c0_i32_1 = arith.constant 0 : i32
    return %c0_i32, %c0_i32_0 : i32, i32
  }
  func.func @transform_2(%arg0: i32) -> (i32, i32) {
    %c0_i32 = arith.constant 0 : i32
    %c0_i32_0 = arith.constant 0 : i32
    %c0_i32_1 = arith.constant 0 : i32
    return %c0_i32, %c0_i32_0 : i32, i32
  }
  func.func @transform_3(%arg0: i32) -> (i32, i32) {
    %c0_i32 = arith.constant 0 : i32
    %c0_i32_0 = arith.constant 0 : i32
    %c0_i32_1 = arith.constant 0 : i32
    return %c0_i32, %c0_i32_0 : i32, i32
  }
  func.func @transform_4(%arg0: i32) -> (i32, i32) {
    %c0_i32 = arith.constant 0 : i32
    %c0_i32_0 = arith.constant 0 : i32
    %c0_i32_1 = arith.constant 0 : i32
    return %c0_i32, %c0_i32_0 : i32, i32
  }
  func.func @transform_5(%arg0: i32) -> (i32, i32) {
    %c0_i32 = arith.constant 0 : i32
    %c0_i32_0 = arith.constant 0 : i32
    %c0_i32_1 = arith.constant 0 : i32
    return %c0_i32, %c0_i32_0 : i32, i32
  }
  func.func @transform_6(%arg0: i32) -> (i32, i32) {
    %c0_i32 = arith.constant 0 : i32
    %c0_i32_0 = arith.constant 0 : i32
    %c0_i32_1 = arith.constant 0 : i32
    return %c0_i32, %c0_i32_0 : i32, i32
  }
  func.func @transform_7(%arg0: i32) -> (i32, i32, i32) {
    %c0_i32 = arith.constant 0 : i32
    %c0_i32_0 = arith.constant 0 : i32
    %c0_i32_1 = arith.constant 0 : i32
    return %arg0, %c0_i32, %c0_i32_0 : i32, i32, i32
  }
}

</mosaic_0001>

<llo_original>
// kernel: tpu_custom_call.1
$region0: #{tpu_custom_call.1}
  #allocation0 [shape = 'u32[]', space=smem, size = 0x4, offset = 0x4, fixed_abs, tag = 'smem constant byte address 0x4 - core index']
  #allocation1 [shape = 'u32[144,128]{1,0:T(1,128)}', space=vmem, size = 0x12000, scoped, tag = 'internal scratch']
  #allocation2 [shape = 'f32[1,1]{1,0:T(1,128)S(1)}', space=vmem, size = 0x200, scoped, tag = 'scoped memory for tpu_custom_call.1']
  %s0 = inlined_call_operand.vmem [shape: f32[96,45], index: 0, kind: input, shape index: {}]
  %s1 = inlined_call_operand.vmem [shape: f32[45,128], index: 1, kind: input, shape index: {}]
  %s2 = inlined_call_operand.vmem [shape: f32[1,128], index: 2, kind: input, shape index: {}]
  %s3 = inlined_call_operand.vmem [shape: f32[128,64], index: 3, kind: input, shape index: {}]
  %s4 = inlined_call_operand.vmem [shape: f32[1,64], index: 4, kind: input, shape index: {}]
  %s5 = inlined_call_operand.vmem [shape: f32[1,64], index: 5, kind: input, shape index: {}]
  %s6 = inlined_call_operand.<no memory space> [shape: f32[1,1], index: 6, kind: input, shape index: {}]
  %s7 = inlined_call_operand.hbm [shape: f32[2,1,48], index: 7, kind: output, shape index: {}]
  %s8 = sld [smem:[#allocation0]]
  $region61: #{tpu_custom_call.1} parent=0
    _
  %s10 = ssub.s32 1, %s8
  %s11 = scalar_select 0, %s10, %s8
  %v12 = vstv %s6
  %13 = vst [vmem:[#allocation2] sm:$0x1] %v12
  $region1: #{tpu_custom_call.1} parent=0
    #allocation3 [shape = 'u8[1024]{0}', space=vmem, size = 0x400, scoped, tag = 'output window, operand 0']
    #allocation4 [shape = 's32[2]{0}', space=sflag, size = 0x8, scoped, tag = 'scoped memory for tpu_custom_call.1']
    %14 = vsyncpa [#allocation4], 0
    %s15 = scalar_lea.sflag [#allocation4], 1
    %16 = vsyncpa %s15, 0
    loop: start=0, step=1, limit=4
    $region2: #{tpu_custom_call.1} parent=1 // loop_pre_header
      _
    $region3: #{tpu_custom_call.1} parent=1 // loop_header
      %s18 = sphi 0, %s22
      %p19 = scmp.ge.s32.totalorder %s18, 4
      %s28 = sphi 0, %s30
      %s31 = sphi 0, %s28
      %s32 = sphi 0, %s31
      %s48 = sphi 0, %s32
      %s52 = sphi 0, %s52
      %s54 = sphi 0, %s52
      %s55 = sphi 0, %s54
      %s69 = sphi 0, %s55
      %s73 = sphi 0, %s73
      %s75 = sphi 0, %s73
      %s76 = sphi 0, %s75
      %s90 = sphi 0, %s76
      %s94 = sphi 0, %s94
      %s96 = sphi 0, %s94
      %s97 = sphi 0, %s96
      %s111 = sphi 0, %s97
      %s115 = sphi 0, %s115
      %s117 = sphi 0, %s115
      %s118 = sphi 0, %s117
      %s132 = sphi 0, %s118
      %s136 = sphi 0, %s136
      %s138 = sphi 0, %s136
      %s139 = sphi 0, %s138
      %s153 = sphi 0, %s139
      %s157 = sphi 0, %s157
      %s159 = sphi 0, %s157
      %s160 = sphi 0, %s159
      %s174 = sphi 0, %s160
      %s180 = sphi 0, %s182
      %s183 = sphi 0, %s180
      %s184 = sphi 0, %s183
      %s200 = sphi 0, %s184
    $region4: #{tpu_custom_call.1} parent=1 // loop_header_branch
      %21 = sbr.rel (%p19) target = $region8
    $region5: #{tpu_custom_call.1} parent=1 // loop_body
      %s23 = ssub.s32 %s18, 1
      %s24 = ssub.s32 %s18, 2
      %s25 = sadd.s32 %s18, 1
      %s26 = ssub.s32 %s18, %s25
      %p27 = scmp.eq.s32.totalorder %s26, 0
      %s29 = sadd.s32 %s28, 1
      %s30 = scalar_select %p27, %s28, %s29
      %p33 = pneg %p27
      %p34 = scmp.eq.s32.totalorder %s18, 1
      %p35 = por %p33, %p34
      %p36 = scmp.ne.s32.totalorder %s28, %s31
      %p37 = scmp.eq.s32.totalorder %s18, 0
      %p38 = por %p36, %p37
      %p39 = scmp.ne.s32.totalorder %s28, %s31
      %p40 = scmp.eq.s32.totalorder %s23, 1
      %p41 = por %p39, %p40
      %p42 = scmp.ne.s32.totalorder %s31, %s32
      %p43 = scmp.eq.s32.totalorder %s23, 0
      %p44 = por %p42, %p43
      %p45 = scmp.ne.s32.totalorder %s31, %s32
      %p46 = scmp.eq.s32.totalorder %s24, 1
      %p47 = por %p45, %p46
      %p49 = scmp.ne.s32.totalorder %s32, %s48
      %p50 = scmp.eq.s32.totalorder %s24, 0
      %p51 = por %p49, %p50
      %s53 = sadd.s32 %s52, 1
      %p56 = scmp.eq.s32.totalorder %s18, 1
      %p57 = scmp.ne.s32.totalorder %s52, %s54
      %p58 = scmp.eq.s32.totalorder %s18, 0
      %p59 = por %p57, %p58
      %p60 = scmp.ne.s32.totalorder %s52, %s54
      %p61 = scmp.eq.s32.totalorder %s23, 1
      %p62 = por %p60, %p61
      %p63 = scmp.ne.s32.totalorder %s54, %s55
      %p64 = scmp.eq.s32.totalorder %s23, 0
      %p65 = por %p63, %p64
      %p66 = scmp.ne.s32.totalorder %s54, %s55
      %p67 = scmp.eq.s32.totalorder %s24, 1
      %p68 = por %p66, %p67
      %p70 = scmp.ne.s32.totalorder %s55, %s69
      %p71 = scmp.eq.s32.totalorder %s24, 0
      %p72 = por %p70, %p71
      %s74 = sadd.s32 %s73, 1
      %p77 = scmp.eq.s32.totalorder %s18, 1
      %p78 = scmp.ne.s32.totalorder %s73, %s75
      %p79 = scmp.eq.s32.totalorder %s18, 0
      %p80 = por %p78, %p79
      %p81 = scmp.ne.s32.totalorder %s73, %s75
      %p82 = scmp.eq.s32.totalorder %s23, 1
      %p83 = por %p81, %p82
      %p84 = scmp.ne.s32.totalorder %s75, %s76
      %p85 = scmp.eq.s32.totalorder %s23, 0
      %p86 = por %p84, %p85
      %p87 = scmp.ne.s32.totalorder %s75, %s76
      %p88 = scmp.eq.s32.totalorder %s24, 1
      %p89 = por %p87, %p88
      %p91 = scmp.ne.s32.totalorder %s76, %s90
      %p92 = scmp.eq.s32.totalorder %s24, 0
      %p93 = por %p91, %p92
      %s95 = sadd.s32 %s94, 1
      %p98 = scmp.eq.s32.totalorder %s18, 1
      %p99 = scmp.ne.s32.totalorder %s94, %s96
      %p100 = scmp.eq.s32.totalorder %s18, 0
      %p101 = por %p99, %p100
      %p102 = scmp.ne.s32.totalorder %s94, %s96
      %p103 = scmp.eq.s32.totalorder %s23, 1
      %p104 = por %p102, %p103
      %p105 = scmp.ne.s32.totalorder %s96, %s97
      %p106 = scmp.eq.s32.totalorder %s23, 0
      %p107 = por %p105, %p106
      %p108 = scmp.ne.s32.totalorder %s96, %s97
      %p109 = scmp.eq.s32.totalorder %s24, 1
      %p110 = por %p108, %p109
      %p112 = scmp.ne.s32.totalorder %s97, %s111
      %p113 = scmp.eq.s32.totalorder %s24, 0
      %p114 = por %p112, %p113
      %s116 = sadd.s32 %s115, 1
      %p119 = scmp.eq.s32.totalorder %s18, 1
      %p120 = scmp.ne.s32.totalorder %s115, %s117
      %p121 = scmp.eq.s32.totalorder %s18, 0
      %p122 = por %p120, %p121
      %p123 = scmp.ne.s32.totalorder %s115, %s117
      %p124 = scmp.eq.s32.totalorder %s23, 1
      %p125 = por %p123, %p124
      %p126 = scmp.ne.s32.totalorder %s117, %s118
      %p127 = scmp.eq.s32.totalorder %s23, 0
      %p128 = por %p126, %p127
      %p129 = scmp.ne.s32.totalorder %s117, %s118
      %p130 = scmp.eq.s32.totalorder %s24, 1
      %p131 = por %p129, %p130
      %p133 = scmp.ne.s32.totalorder %s118, %s132
      %p134 = scmp.eq.s32.totalorder %s24, 0
      %p135 = por %p133, %p134
      %s137 = sadd.s32 %s136, 1
      %p140 = scmp.eq.s32.totalorder %s18, 1
      %p141 = scmp.ne.s32.totalorder %s136, %s138
      %p142 = scmp.eq.s32.totalorder %s18, 0
      %p143 = por %p141, %p142
      %p144 = scmp.ne.s32.totalorder %s136, %s138
      %p145 = scmp.eq.s32.totalorder %s23, 1
      %p146 = por %p144, %p145
      %p147 = scmp.ne.s32.totalorder %s138, %s139
      %p148 = scmp.eq.s32.totalorder %s23, 0
      %p149 = por %p147, %p148
      %p150 = scmp.ne.s32.totalorder %s138, %s139
      %p151 = scmp.eq.s32.totalorder %s24, 1
      %p152 = por %p150, %p151
      %p154 = scmp.ne.s32.totalorder %s139, %s153
      %p155 = scmp.eq.s32.totalorder %s24, 0
      %p156 = por %p154, %p155
      %s158 = sadd.s32 %s157, 1
      %p161 = scmp.eq.s32.totalorder %s18, 1
      %p162 = scmp.ne.s32.totalorder %s157, %s159
      %p163 = scmp.eq.s32.totalorder %s18, 0
      %p164 = por %p162, %p163
      %p165 = scmp.ne.s32.totalorder %s157, %s159
      %p166 = scmp.eq.s32.totalorder %s23, 1
      %p167 = por %p165, %p166
      %p168 = scmp.ne.s32.totalorder %s159, %s160
      %p169 = scmp.eq.s32.totalorder %s23, 0
      %p170 = por %p168, %p169
      %p171 = scmp.ne.s32.totalorder %s159, %s160
      %p172 = scmp.eq.s32.totalorder %s24, 1
      %p173 = por %p171, %p172
      %p175 = scmp.ne.s32.totalorder %s160, %s174
      %p176 = scmp.eq.s32.totalorder %s24, 0
      %p177 = por %p175, %p176
      %s178 = ssub.s32 %s18, %s25
      %p179 = scmp.eq.s32.totalorder %s178, 0
      %s181 = sadd.s32 %s180, 1
      %s182 = scalar_select %p179, %s180, %s181
      %p185 = pneg %p179
      %p186 = scmp.eq.s32.totalorder %s18, 1
      %p187 = por %p185, %p186
      %p188 = scmp.ne.s32.totalorder %s180, %s183
      %p189 = scmp.eq.s32.totalorder %s18, 0
      %p190 = por %p188, %p189
      %p191 = scmp.ne.s32.totalorder %s180, %s183
      %p192 = scmp.eq.s32.totalorder %s23, 1
      %p193 = por %p191, %p192
      %p194 = scmp.ne.s32.totalorder %s183, %s184
      %p195 = scmp.eq.s32.totalorder %s23, 0
      %p196 = por %p194, %p195
      %p197 = scmp.ne.s32.totalorder %s183, %s184
      %p198 = scmp.eq.s32.totalorder %s24, 1
      %p199 = por %p197, %p198
      %p201 = scmp.ne.s32.totalorder %s184, %s200
      %p202 = scmp.eq.s32.totalorder %s24, 0
      %p203 = por %p201, %p202
      %p204 = scmp.le.s32.totalorder 1, %s18
      %p205 = scmp.lt.s32.totalorder %s18, 3
      %p206 = pnand %p204, %p205
      %p207 = pneg %p206
      // Predicated region
      $region9: #{tpu_custom_call.1} parent=5 // pred_check
        _
      $region10: #{tpu_custom_call.1} parent=5 // pred_check_branch
        %209 = sbr.rel (%p206) target = $region12
      $region11: #{tpu_custom_call.1} parent=5 // pred_region
        %s210 = ssub.s32 %s18, 1
        // Predicated region
        $region13: #{tpu_custom_call.1} parent=11 // pred_check
          %p211 = pneg %p65
        $region14: #{tpu_custom_call.1} parent=11 // pred_check_branch
          %213 = sbr.rel (%p211) target = $region16
        $region15: #{tpu_custom_call.1} parent=11 // pred_region
          _
        $region16: #{tpu_custom_call.1} parent=11 // pred_fallthru
          _
        // Predicated region
        $region17: #{tpu_custom_call.1} parent=11 // pred_check
          %p214 = pneg %p86
        $region18: #{tpu_custom_call.1} parent=11 // pred_check_branch
          %216 = sbr.rel (%p214) target = $region20
        $region19: #{tpu_custom_call.1} parent=11 // pred_region
          _
        $region20: #{tpu_custom_call.1} parent=11 // pred_fallthru
          _
        // Predicated region
        $region21: #{tpu_custom_call.1} parent=11 // pred_check
          %p217 = pneg %p107
        $region22: #{tpu_custom_call.1} parent=11 // pred_check_branch
          %219 = sbr.rel (%p217) target = $region24
        $region23: #{tpu_custom_call.1} parent=11 // pred_region
          _
        $region24: #{tpu_custom_call.1} parent=11 // pred_fallthru
          _
        // Predicated region
        $region25: #{tpu_custom_call.1} parent=11 // pred_check
          %p220 = pneg %p128
        $region26: #{tpu_custom_call.1} parent=11 // pred_check_branch
          %222 = sbr.rel (%p220) target = $region28
        $region27: #{tpu_custom_call.1} parent=11 // pred_region
          _
        $region28: #{tpu_custom_call.1} parent=11 // pred_fallthru
          _
        // Predicated region
        $region29: #{tpu_custom_call.1} parent=11 // pred_check
          %p223 = pneg %p149
        $region30: #{tpu_custom_call.1} parent=11 // pred_check_branch
          %225 = sbr.rel (%p223) target = $region32
        $region31: #{tpu_custom_call.1} parent=11 // pred_region
          _
        $region32: #{tpu_custom_call.1} parent=11 // pred_fallthru
          _
        // Predicated region
        $region33: #{tpu_custom_call.1} parent=11 // pred_check
          %p226 = pneg %p170
        $region34: #{tpu_custom_call.1} parent=11 // pred_check_branch
          %228 = sbr.rel (%p226) target = $region36
        $region35: #{tpu_custom_call.1} parent=11 // pred_region
          _
        $region36: #{tpu_custom_call.1} parent=11 // pred_fallthru
          _
      $region12: #{tpu_custom_call.1} parent=5 // pred_fallthru
        _
      %p229 = scmp.lt.s32.totalorder %s18, 2
      // Predicated region
      $region37: #{tpu_custom_call.1} parent=5 // pred_check
        %p230 = pneg %p229
      $region38: #{tpu_custom_call.1} parent=5 // pred_check_branch
        %232 = sbr.rel (%p230) target = $region40
      $region39: #{tpu_custom_call.1} parent=5 // pred_region
        // Predicated region
        $region41: #{tpu_custom_call.1} parent=39 // pred_check
          %p233 = pneg %p38
        $region42: #{tpu_custom_call.1} parent=39 // pred_check_branch
          %235 = sbr.rel (%p233) target = $region44
        $region43: #{tpu_custom_call.1} parent=39 // pred_region
          %s236 = smul.u32 6, %s18
          %p237 = scmp.lt.s32.totalorder %s236, 11
          %s238 = scalar_select %p237, %s236, 11
          %s239 = smul.addr %s238, 8
          %s240 = scalar_lea.vmem %s0, %s239
          %s241 = smul.u32 6, %s18
        $region44: #{tpu_custom_call.1} parent=39 // pred_fallthru
          _
      $region40: #{tpu_custom_call.1} parent=5 // pred_fallthru
        _
      %p242 = scmp.le.s32.totalorder 1, %s18
      %p243 = scmp.lt.s32.totalorder %s18, 3
      %p244 = pnand %p242, %p243
      %p245 = pneg %p244
      // Predicated region
      $region45: #{tpu_custom_call.1} parent=5 // pred_check
        _
      $region46: #{tpu_custom_call.1} parent=5 // pred_check_branch
        %247 = sbr.rel (%p244) target = $region48
      $region47: #{tpu_custom_call.1} parent=5 // pred_region
        %s248 = ssub.s32 %s18, 1
        %s249 = smul.u32 6, %s23
        %p250 = scmp.lt.s32.totalorder %s249, 11
        %s251 = scalar_select %p250, %s249, 11
        %s252 = smul.addr %s251, 8
        %s253 = scalar_lea.vmem %s0, %s252
        %p254 = pneg %p44
        %p255 = pneg %p41
        %p256 = pneg %p65
        %p257 = pneg %p62
        %p258 = pneg %p86
        %p259 = pneg %p83
        %p260 = pneg %p107
        %p261 = pneg %p104
        %p262 = pneg %p128
        %p263 = pneg %p125
        %p264 = pneg %p149
        %p265 = pneg %p146
        %p266 = pneg %p170
        %p267 = pneg %p167
        %p268 = pneg %p196
        %p269 = pneg %p193
        %s270 = sand.u32 %s183, 1
        %s271 = scalar_lea.sflag [#allocation4], %s270
        %s272 = sand.u32 %s183, 1
        %s273 = scalar_lea.vmem [#allocation3], %s272
        %s274 = smul.u32 6, %s23
        %p275 = scmp.lt.s32.totalorder %s274, 11
        %s276 = scalar_select %p275, %s274, 11
        %s277 = smul.addr %s276, 8
        %s278 = scalar_lea.vmem %s0, %s277
        %s279 = smul.u32 6, %s23
        %v280 = vld [vmem:[%s278] sm:$0xff]
        %v281 = vld [vmem:[%s278 + $0x8] sm:$0xff]
        %v282 = vld [vmem:[%s278 + $0x10] sm:$0xff]
        %v283 = vld [vmem:[%s278 + $0x18] sm:$0xff]
        %v284 = vld [vmem:[%s278 + $0x20] sm:$0xff]
        %v285 = vld [vmem:[%s278 + $0x28] sm:$0xff]
        %v286 = vld [vmem:[%s1] sm:$0xff]
        %v287 = vld [vmem:[%s1 + $0x8] sm:$0xff]
        %v288 = vld [vmem:[%s1 + $0x10] sm:$0xff]
        %v289 = vld [vmem:[%s1 + $0x18] sm:$0xff]
        %v290 = vld [vmem:[%s1 + $0x20] sm:$0xff]
        %v291 = vld [vmem:[%s1 + $0x28] sm:$0x1f]
        %v292 = vld [vmem:[%s2] sm:$0x1]
        %v294 = vlaneseq
        %v295 = vshrl.u32 %v294, 7
        %v296 = vsub.s32 0, %v295
        %v297 = vrot.slane %v292, %v296
        %vm299 = vcmask 367616
        %v301 = vsel %vm299, %v280, 0
        %v304 = vsel %vm299, %v281, 0
        %v307 = vsel %vm299, %v282, 0
        %v310 = vsel %vm299, %v283, 0
        %v313 = vsel %vm299, %v284, 0
        %v316 = vsel %vm299, %v285, 0
        %vm318 = vcmask 1044480
        %v320 = vsel %vm318, %v291, 0
        %322 = vmatprep.subr.mxu0 0.0
        %323 = vmatpush1.msra.mxu0 %v286
        %324 = vmatprep.subr.mxu0 0.0
        %325 = vmatpush1.msra.mxu0 %v287
        %326 = vmatprep.subr.mxu0 0.0
        %327 = vmatpush1.msra.mxu0 %v288
        %328 = vmatprep.subr.mxu0 0.0
        %329 = vmatpush1.msra.mxu0 %v289
        %330 = vmatprep.subr.mxu0 0.0
        %331 = vmatpush1.msra.mxu0 %v290
        %332 = vmatprep.subr.mxu0 0.0
        %333 = vmatpush1.msra.mxu0 %v320
        %334 = vmatprep.subr.mxu0 0.0
        %335 = vmatpush1.msra.mxu0 0.0
        %336 = vmatprep.subr.mxu0 0.0
        %337 = vmatpush1.msra.mxu0 0.0
        %338 = vmatprep.subr.mxu0 0.0
        %339 = vmatpush1.msra.mxu0 0.0
        %340 = vmatprep.subr.mxu0 0.0
        %341 = vmatpush1.msra.mxu0 0.0
        %342 = vmatprep.subr.mxu0 0.0
        %343 = vmatpush1.msra.mxu0 0.0
        %344 = vmatprep.subr.mxu0 0.0
        %345 = vmatpush1.msra.mxu0 0.0
        %346 = vmatprep.subr.mxu0 0.0
        %347 = vmatpush1.msra.mxu0 0.0
        %348 = vmatprep.subr.mxu0 0.0
        %349 = vmatpush1.msra.mxu0 0.0
        %350 = vmatprep.subr.mxu0 0.0
        %351 = vmatpush1.msra.mxu0 0.0
        %352 = vmatprep.subr.mxu0 0.0
        %353 = vmatpush1.msra.mxu0 0.0
        %354 = vmatprep.subr.mxu0 0.0
        %355 = vmatpush1.msra.mxu0 0.0
        %356 = vmatprep.subr.mxu0 0.0
        %357 = vmatpush1.msra.mxu0 0.0
        %358 = vmatprep.subr.mxu0 0.0
        %359 = vmatpush1.msra.mxu0 0.0
        %360 = vmatprep.subr.mxu0 0.0
        %361 = vmatpush1.msra.mxu0 0.0
        %362 = vmatprep.subr.mxu0 0.0
        %363 = vmatpush1.msra.mxu0 0.0
        %364 = vmatprep.subr.mxu0 0.0
        %365 = vmatpush1.msra.mxu0 0.0
        %366 = vmatprep.subr.mxu0 0.0
        %367 = vmatpush1.msra.mxu0 0.0
        %368 = vmatprep.subr.mxu0 0.0
        %369 = vmatpush1.msra.mxu0 0.0
        %370 = vmatprep.subr.mxu0 0.0
        %371 = vmatpush1.msra.mxu0 0.0
        %372 = vmatprep.subr.mxu0 0.0
        %373 = vmatpush1.msra.mxu0 0.0
        %374 = vmatprep.subr.mxu0 0.0
        %375 = vmatpush1.msra.mxu0 0.0
        %376 = vmatprep.subr.mxu0 0.0
        %377 = vmatpush1.msra.mxu0 0.0
        %378 = vmatprep.subr.mxu0 0.0
        %379 = vmatpush1.msra.mxu0 0.0
        %380 = vmatprep.subr.mxu0 0.0
        %381 = vmatpush1.msra.mxu0 0.0
        %382 = vmatprep.subr.mxu0 0.0
        %383 = vmatpush1.msra.mxu0 0.0
        %384 = vmatprep.subr.mxu0 0.0
        %385 = vmatpush1.msra.mxu0 0.0
        %386 = vmatprep.mubr.f32.mxu0 0.0
        %387 = vmatmul.mubr.f32.gmra.mrb[0].mxu0 %v301
        %v388 = vpop.f32.mrb[0].mxu0
        %v389 = vadd.f32 %v297, %v388
        %v390 = vpop.f32.mrb[0].mxu0
        %391 = vmatprep.mubr.f32.mxu0 0.0
        %392 = vmatmul.mubr.f32.gmra.mrb[0].mxu0 %v304
        %v393 = vpop.f32.mrb[0].mxu0
        %v394 = vadd.f32 %v297, %v393
        %v395 = vpop.f32.mrb[0].mxu0
        %396 = vmatprep.mubr.f32.mxu0 0.0
        %397 = vmatmul.mubr.f32.gmra.mrb[0].mxu0 %v307
        %v398 = vpop.f32.mrb[0].mxu0
        %v399 = vadd.f32 %v297, %v398
        %v400 = vpop.f32.mrb[0].mxu0
        %401 = vmatprep.mubr.f32.mxu0 0.0
        %402 = vmatmul.mubr.f32.gmra.mrb[0].mxu0 %v310
        %v403 = vpop.f32.mrb[0].mxu0
        %v404 = vadd.f32 %v297, %v403
        %v405 = vpop.f32.mrb[0].mxu0
        %406 = vmatprep.mubr.f32.mxu0 0.0
        %407 = vmatmul.mubr.f32.gmra.mrb[0].mxu0 %v313
        %v408 = vpop.f32.mrb[0].mxu0
        %v409 = vadd.f32 %v297, %v408
        %v410 = vpop.f32.mrb[0].mxu0
        %411 = vmatprep.mubr.f32.mxu0 0.0
        %412 = vmatmul.mubr.f32.gmra.mrb[0].mxu0 %v316
        %v413 = vpop.f32.mrb[0].mxu0
        %v414 = vadd.f32 %v297, %v413
        %v415 = vpop.f32.mrb[0].mxu0
        %416 = vdwg.mxu0
        %v417 = vmax.f32 %v389, 0.0
        %v418 = vmax.f32 %v394, 0.0
        %v419 = vmax.f32 %v399, 0.0
        %v420 = vmax.f32 %v404, 0.0
        %v421 = vmax.f32 %v409, 0.0
        %v422 = vmax.f32 %v414, 0.0
        %v423 = vld [vmem:[%s3] sm:$0xff]
        %v424 = vld [vmem:[%s3 + $0x8] sm:$0xff]
        %v425 = vld [vmem:[%s3 + $0x10] sm:$0xff]
        %v426 = vld [vmem:[%s3 + $0x18] sm:$0xff]
        %v427 = vld [vmem:[%s3 + $0x20] sm:$0xff]
        %v428 = vld [vmem:[%s3 + $0x28] sm:$0xff]
        %v429 = vld [vmem:[%s3 + $0x30] sm:$0xff]
        %v430 = vld [vmem:[%s3 + $0x38] sm:$0xff]
        %v431 = vld [vmem:[%s3 + $0x40] sm:$0xff]
        %v432 = vld [vmem:[%s3 + $0x48] sm:$0xff]
        %v433 = vld [vmem:[%s3 + $0x50] sm:$0xff]
        %v434 = vld [vmem:[%s3 + $0x58] sm:$0xff]
        %v435 = vld [vmem:[%s3 + $0x60] sm:$0xff]
        %v436 = vld [vmem:[%s3 + $0x68] sm:$0xff]
        %v437 = vld [vmem:[%s3 + $0x70] sm:$0xff]
        %v438 = vld [vmem:[%s3 + $0x78] sm:$0xff]
        %v439 = vld [vmem:[%s4] sm:$0x1]
        %v441 = vlaneseq
        %v442 = vshrl.u32 %v441, 7
        %v443 = vsub.s32 0, %v442
        %v444 = vrot.slane %v439, %v443
        %446 = vmatprep.subr.mxu0 0.0
        %447 = vmatpush1.msra.mxu0 %v423
        %448 = vmatprep.subr.mxu0 0.0
        %449 = vmatpush1.msra.mxu0 %v424
        %450 = vmatprep.subr.mxu0 0.0
        %451 = vmatpush1.msra.mxu0 %v425
        %452 = vmatprep.subr.mxu0 0.0
        %453 = vmatpush1.msra.mxu0 %v426
        %454 = vmatprep.subr.mxu0 0.0
        %455 = vmatpush1.msra.mxu0 %v427
        %456 = vmatprep.subr.mxu0 0.0
        %457 = vmatpush1.msra.mxu0 %v428
        %458 = vmatprep.subr.mxu0 0.0
        %459 = vmatpush1.msra.mxu0 %v429
        %460 = vmatprep.subr.mxu0 0.0
        %461 = vmatpush1.msra.mxu0 %v430
        %462 = vmatprep.subr.mxu0 0.0
        %463 = vmatpush1.msra.mxu0 %v431
        %464 = vmatprep.subr.mxu0 0.0
        %465 = vmatpush1.msra.mxu0 %v432
        %466 = vmatprep.subr.mxu0 0.0
        %467 = vmatpush1.msra.mxu0 %v433
        %468 = vmatprep.subr.mxu0 0.0
        %469 = vmatpush1.msra.mxu0 %v434
        %470 = vmatprep.subr.mxu0 0.0
        %471 = vmatpush1.msra.mxu0 %v435
        %472 = vmatprep.subr.mxu0 0.0
        %473 = vmatpush1.msra.mxu0 %v436
        %474 = vmatprep.subr.mxu0 0.0
        %475 = vmatpush1.msra.mxu0 %v437
        %476 = vmatprep.subr.mxu0 0.0
        %477 = vmatpush1.msra.mxu0 %v438
        %478 = vmatprep.subr.mxu0 0.0
        %479 = vmatpush1.msra.mxu0 0.0
        %480 = vmatprep.subr.mxu0 0.0
        %481 = vmatpush1.msra.mxu0 0.0
        %482 = vmatprep.subr.mxu0 0.0
        %483 = vmatpush1.msra.mxu0 0.0
        %484 = vmatprep.subr.mxu0 0.0
        %485 = vmatpush1.msra.mxu0 0.0
        %486 = vmatprep.subr.mxu0 0.0
        %487 = vmatpush1.msra.mxu0 0.0
        %488 = vmatprep.subr.mxu0 0.0
        %489 = vmatpush1.msra.mxu0 0.0
        %490 = vmatprep.subr.mxu0 0.0
        %491 = vmatpush1.msra.mxu0 0.0
        %492 = vmatprep.subr.mxu0 0.0
        %493 = vmatpush1.msra.mxu0 0.0
        %494 = vmatprep.subr.mxu0 0.0
        %495 = vmatpush1.msra.mxu0 0.0
        %496 = vmatprep.subr.mxu0 0.0
        %497 = vmatpush1.msra.mxu0 0.0
        %498 = vmatprep.subr.mxu0 0.0
        %499 = vmatpush1.msra.mxu0 0.0
        %500 = vmatprep.subr.mxu0 0.0
        %501 = vmatpush1.msra.mxu0 0.0
        %502 = vmatprep.subr.mxu0 0.0
        %503 = vmatpush1.msra.mxu0 0.0
        %504 = vmatprep.subr.mxu0 0.0
        %505 = vmatpush1.msra.mxu0 0.0
        %506 = vmatprep.subr.mxu0 0.0
        %507 = vmatpush1.msra.mxu0 0.0
        %508 = vmatprep.subr.mxu0 0.0
        %509 = vmatpush1.msra.mxu0 0.0
        %510 = vmatprep.mubr.f32.mxu0 0.0
        %511 = vmatmul.mubr.f32.gmra.mrb[0].mxu0 %v417
        %v512 = vpop.f32.mrb[0].mxu0
        %v513 = vadd.f32 %v444, %v512
        %v514 = vpop.f32.mrb[0].mxu0
        %515 = vmatprep.mubr.f32.mxu0 0.0
        %516 = vmatmul.mubr.f32.gmra.mrb[0].mxu0 %v418
        %v517 = vpop.f32.mrb[0].mxu0
        %v518 = vadd.f32 %v444, %v517
        %v519 = vpop.f32.mrb[0].mxu0
        %520 = vmatprep.mubr.f32.mxu0 0.0
        %521 = vmatmul.mubr.f32.gmra.mrb[0].mxu0 %v419
        %v522 = vpop.f32.mrb[0].mxu0
        %v523 = vadd.f32 %v444, %v522
        %v524 = vpop.f32.mrb[0].mxu0
        %525 = vmatprep.mubr.f32.mxu0 0.0
        %526 = vmatmul.mubr.f32.gmra.mrb[0].mxu0 %v420
        %v527 = vpop.f32.mrb[0].mxu0
        %v528 = vadd.f32 %v444, %v527
        %v529 = vpop.f32.mrb[0].mxu0
        %530 = vmatprep.mubr.f32.mxu0 0.0
        %531 = vmatmul.mubr.f32.gmra.mrb[0].mxu0 %v421
        %v532 = vpop.f32.mrb[0].mxu0
        %v533 = vadd.f32 %v444, %v532
        %v534 = vpop.f32.mrb[0].mxu0
        %535 = vmatprep.mubr.f32.mxu0 0.0
        %536 = vmatmul.mubr.f32.gmra.mrb[0].mxu0 %v422
        %v537 = vpop.f32.mrb[0].mxu0
        %v538 = vadd.f32 %v444, %v537
        %v539 = vpop.f32.mrb[0].mxu0
        %540 = vdwg.mxu0
        %v541 = vmax.f32 %v513, 0.0
        %v542 = vmax.f32 %v518, 0.0
        %v543 = vmax.f32 %v523, 0.0
        %v544 = vmax.f32 %v528, 0.0
        %v545 = vmax.f32 %v533, 0.0
        %v546 = vmax.f32 %v538, 0.0
        %v547 = vld [vmem:[%s5] sm:$0x1]
        %v548 = vld [vmem:[#allocation2] sm:$0x1]
        %550 = vset.pattern.permute.xlu0 0
        %551 = vperm.xlu0 %550, %v548
        %v552 = vpop.permute.xlu0 %551
        %v554 = vlaneseq
        %v555 = vshrl.u32 %v554, 7
        %v556 = vsub.s32 0, %v555
        %v557 = vrot.slane %v552, %v556
        %vm558 = vcmask 523264
        %v560 = vsel %vm558, %v547, 0
        %v563 = vsel %vm558, %v541, 0
        %v566 = vsel %vm558, %v542, 0
        %v569 = vsel %vm558, %v543, 0
        %v572 = vsel %vm558, %v544, 0
        %v575 = vsel %vm558, %v545, 0
        %v578 = vsel %vm558, %v546, 0
        %580 = vmatprep.subr.mxu0 0.0
        %581 = vmatpush1.xpose.msra.mxu0 %v563
        %582 = vmatprep.subr.mxu0 0.0
        %583 = vmatpush1.xpose.msra.mxu0 %v566
        %584 = vmatprep.subr.mxu0 0.0
        %585 = vmatpush1.xpose.msra.mxu0 %v569
        %586 = vmatprep.subr.mxu0 0.0
        %587 = vmatpush1.xpose.msra.mxu0 %v572
        %588 = vmatprep.subr.mxu0 0.0
        %589 = vmatpush1.xpose.msra.mxu0 %v575
        %590 = vmatprep.subr.mxu0 0.0
        %591 = vmatpush1.xpose.msra.mxu0 %v578
        %592 = vmatprep.subr.mxu0 0.0
        %593 = vmatpush1.xpose.msra.mxu0 0.0
        %594 = vmatprep.subr.mxu0 0.0
        %595 = vmatpush1.xpose.msra.mxu0 0.0
        %596 = vmatprep.subr.mxu0 0.0
        %597 = vmatpush1.xpose.msra.mxu0 0.0
        %598 = vmatprep.subr.mxu0 0.0
        %599 = vmatpush1.xpose.msra.mxu0 0.0
        %600 = vmatprep.subr.mxu0 0.0
        %601 = vmatpush1.xpose.msra.mxu0 0.0
        %602 = vmatprep.subr.mxu0 0.0
        %603 = vmatpush1.xpose.msra.mxu0 0.0
        %604 = vmatprep.subr.mxu0 0.0
        %605 = vmatpush1.xpose.msra.mxu0 0.0
        %606 = vmatprep.subr.mxu0 0.0
        %607 = vmatpush1.xpose.msra.mxu0 0.0
        %608 = vmatprep.subr.mxu0 0.0
        %609 = vmatpush1.xpose.msra.mxu0 0.0
        %610 = vmatprep.subr.mxu0 0.0
        %611 = vmatpush1.xpose.msra.mxu0 0.0
        %612 = vmatprep.subr.mxu0 0.0
        %613 = vmatpush1.xpose.msra.mxu0 0.0
        %614 = vmatprep.subr.mxu0 0.0
        %615 = vmatpush1.xpose.msra.mxu0 0.0
        %616 = vmatprep.subr.mxu0 0.0
        %617 = vmatpush1.xpose.msra.mxu0 0.0
        %618 = vmatprep.subr.mxu0 0.0
        %619 = vmatpush1.xpose.msra.mxu0 0.0
        %620 = vmatprep.subr.mxu0 0.0
        %621 = vmatpush1.xpose.msra.mxu0 0.0
        %622 = vmatprep.subr.mxu0 0.0
        %623 = vmatpush1.xpose.msra.mxu0 0.0
        %624 = vmatprep.subr.mxu0 0.0
        %625 = vmatpush1.xpose.msra.mxu0 0.0
        %626 = vmatprep.subr.mxu0 0.0
        %627 = vmatpush1.xpose.msra.mxu0 0.0
        %628 = vmatprep.subr.mxu0 0.0
        %629 = vmatpush1.xpose.msra.mxu0 0.0
        %630 = vmatprep.subr.mxu0 0.0
        %631 = vmatpush1.xpose.msra.mxu0 0.0
        %632 = vmatprep.subr.mxu0 0.0
        %633 = vmatpush1.xpose.msra.mxu0 0.0
        %634 = vmatprep.subr.mxu0 0.0
        %635 = vmatpush1.xpose.msra.mxu0 0.0
        %636 = vmatprep.subr.mxu0 0.0
        %637 = vmatpush1.xpose.msra.mxu0 0.0
        %638 = vmatprep.subr.mxu0 0.0
        %639 = vmatpush1.xpose.msra.mxu0 0.0
        %640 = vmatprep.subr.mxu0 0.0
        %641 = vmatpush1.xpose.msra.mxu0 0.0
        %642 = vmatprep.subr.mxu0 0.0
        %643 = vmatpush1.xpose.msra.mxu0 0.0
        %644 = vmatprep.mubr.f32.mxu0 0.0
        %645 = vmatmul.mubr.f32.gmra.mrb[0].mxu0 %v560
        %v646 = vpop.f32.mrb[0].mxu0
        %v647 = vadd.f32 %v557, %v646
        %v648 = vpop.f32.mrb[0].mxu0
        %649 = vdwg.mxu0
        %vm650 = vcmask 385024
        %651 = vst.msk [vmem:[%s273] sm:$0x1] %vm650, %v647
        %s652 = sand.u32 %s183, 1
        %s653 = scalar_lea.sflag [#allocation4], %s652
        %s654 = sand.u32 %s183, 1
        %s655 = scalar_lea.vmem [#allocation3], %s654
        // Predicated region
        $region49: #{tpu_custom_call.1} parent=47 // pred_check
          %p656 = pneg %p193
        $region50: #{tpu_custom_call.1} parent=47 // pred_check_branch
          %658 = sbr.rel (%p656) target = $region52
        $region51: #{tpu_custom_call.1} parent=47 // pred_region
          %s660 = ssub.s32 16, 16
          %661 = vsyncadd %s653, %s660
          %s662 = smul.addr %s23, 16
          %s663 = scalar_lea.hbm %s7, %s662
          %s665 = sshll.u32 %s655, 4
          %s666 = int_to_ptr.vmem [resolvable:$true] %s665
          %668 = dma.vmem_to_hbm [thread:$0]  %s666, 16, %s663, %s653
        $region52: #{tpu_custom_call.1} parent=47 // pred_fallthru
          _
      $region48: #{tpu_custom_call.1} parent=5 // pred_fallthru
        _
      %p669 = scmp.le.s32.totalorder 2, %s18
      // Predicated region
      $region53: #{tpu_custom_call.1} parent=5 // pred_check
        %p670 = pneg %p669
      $region54: #{tpu_custom_call.1} parent=5 // pred_check_branch
        %672 = sbr.rel (%p670) target = $region56
      $region55: #{tpu_custom_call.1} parent=5 // pred_region
        %s673 = ssub.s32 %s18, 2
        // Predicated region
        $region57: #{tpu_custom_call.1} parent=55 // pred_check
          %p674 = pneg %p199
        $region58: #{tpu_custom_call.1} parent=55 // pred_check_branch
          %676 = sbr.rel (%p674) target = $region60
        $region59: #{tpu_custom_call.1} parent=55 // pred_region
          %s677 = sand.u32 %s184, 1
          %s678 = scalar_lea.sflag [#allocation4], %s677
          %s679 = sand.u32 %s184, 1
          %s680 = scalar_lea.vmem [#allocation3], %s679
          %681 = dma.done %s678, 16
        $region60: #{tpu_custom_call.1} parent=55 // pred_fallthru
          _
      $region56: #{tpu_custom_call.1} parent=5 // pred_fallthru
        _
    $region6: #{tpu_custom_call.1} parent=1 // loop_footer
      %s22 = sadd.s32 1, %s18
    $region7: #{tpu_custom_call.1} parent=1 // loop_footer_branch
      %17 = sbr.rel target = $region3
    $region8: #{tpu_custom_call.1} parent=1 // loop_exit
      _
    %682 = vsyncpa [#allocation4], 1
    %s683 = scalar_lea.sflag [#allocation4], 1
    %684 = vsyncpa %s683, 1

</llo_original>
